<compile_context>
chip_gen: v5e
topology: v5e:2x2
jax: 0.10.0
libtpu: 0.0.40
codegen_flags: <defaults>
</compile_context>

<pallas_src>
import functools

import numpy as np

import jax
import jax.numpy as jnp
from jax.experimental import pallas as pl
from jax.experimental.pallas import tpu as pltpu

LANES = 128
SUBLANES = 8
SPLIT = 2               # leading "parallel" grid axis (2 TCs on v7x; harmless elsewhere)
MAX_TILE_ROWS = 2048    # 2048 * 128 * 4B = 1 MiB per f32 tile -> 2 MiB double-buffered


def _cdiv(a, b):
    return -(-a // b)


def _round_up(a, b):
    return _cdiv(a, b) * b


# ----------------------------------------------------------------------------
# Shape-only packing metadata (cached): per-row weights + tiling geometry.
# ----------------------------------------------------------------------------
_PACK_CACHE = {}


def _packing_meta(shapes):
    key = tuple(shapes)
    cached = _PACK_CACHE.get(key)
    if cached is not None:
        return cached

    rows_per_param = []
    row_w = []
    for shp in shapes:
        n = int(np.prod(shp, dtype=np.int64)) if len(shp) else 1
        r = _cdiv(n, LANES)                      # pad each param to lane multiple
        rows_per_param.append(r)
        row_w.append(np.full((r,), 1.0 / n, dtype=np.float32))

    r_total = sum(rows_per_param)
    tile_r = min(MAX_TILE_ROWS,
                 max(SUBLANES, _round_up(_cdiv(r_total, SPLIT), SUBLANES)))
    inner_tiles = max(1, _cdiv(r_total, SPLIT * tile_r))
    r_padded = SPLIT * inner_tiles * tile_r

    w = np.zeros((r_padded, 1), dtype=np.float32)    # pad rows get weight 0
    w[:r_total, 0] = np.concatenate(row_w)

    meta = (tuple(rows_per_param), tile_r, inner_tiles, r_padded, jnp.asarray(w))
    _PACK_CACHE[key] = meta
    return meta


# ----------------------------------------------------------------------------
# Kernel: fused base loss (MSE, mean) + L1 regularisation reduction.
# ----------------------------------------------------------------------------
def _reg_loss_kernel(pred_ref, tgt_ref, slab_ref, roww_ref, o_ref, acc_ref, *,
                     factor, pred_numel, inner_tiles):
    c = pl.program_id(0)            # "parallel" half of the row range
    i = pl.program_id(1)            # "arbitrary" reduction axis over row tiles
    last = inner_tiles - 1

    @pl.when(i == 0)
    def _init():
        acc_ref[...] = jnp.zeros_like(acc_ref)

    # |x| * (1/numel(p)) per row, folded into an (8,128) vreg accumulator with
    # pure VPU adds; the cross-lane reduce happens only once, at the last step.
    x = jnp.abs(slab_ref[...].astype(jnp.float32)) * roww_ref[...].astype(jnp.float32)
    acc_ref[...] += jnp.sum(x.reshape(-1, SUBLANES, LANES), axis=0)

    @pl.when(jnp.logical_and(i == last, c != 0))
    def _finalize_other():
        res = jnp.float32(factor) * jnp.sum(acc_ref[...])
        o_ref[...] = jnp.full(o_ref.shape, res, o_ref.dtype)

    @pl.when(jnp.logical_and(i == last, c == 0))
    def _finalize_first():
        # Base loss: mean((pred - target)^2)  -- the wrapped self.loss (MSELoss).
        diff = pred_ref[...].astype(jnp.float32) - tgt_ref[...].astype(jnp.float32)
        base = jnp.sum(diff * diff) * jnp.float32(1.0 / pred_numel)
        res = base + jnp.float32(factor) * jnp.sum(acc_ref[...])
        o_ref[...] = jnp.full(o_ref.shape, res, o_ref.dtype)


# ----------------------------------------------------------------------------
# Wrapper: JAX/Pallas equivalent of RegLossWrapper(nn.MSELoss(), model).forward
# ----------------------------------------------------------------------------
def reg_loss_wrapper(pred, target, params, factor=0.0005):
    shapes = tuple(tuple(int(d) for d in p.shape) for p in params)
    rows_per_param, tile_r, inner_tiles, r_padded, row_w = _packing_meta(shapes)

    # Pack non-bias params into a lane-dense (rows, 128) slab, each param padded
    # independently so a row never straddles two parameters.  Native dtype kept.
    slab_dtype = jnp.result_type(*[p.dtype for p in params])
    blocks = []
    for p, r in zip(params, rows_per_param):
        f = p.reshape(-1).astype(slab_dtype)
        pad = r * LANES - f.size
        blocks.append(jnp.pad(f, (0, pad)).reshape(r, LANES))
    slab = jnp.concatenate(blocks, axis=0)
    if slab.shape[0] != r_padded:
        slab = jnp.pad(slab, ((0, r_padded - slab.shape[0]), (0, 0)))

    kernel = functools.partial(_reg_loss_kernel,
                               factor=float(factor),
                               pred_numel=int(pred.size),
                               inner_tiles=int(inner_tiles))

    grid_spec = pltpu.PrefetchScalarGridSpec(
        num_scalar_prefetch=0,
        grid=(SPLIT, inner_tiles),
        in_specs=[
            # pred / target stay resident (constant block index across the grid).
            pl.BlockSpec(pred.shape, lambda c, i: (0, 0)),
            pl.BlockSpec(target.shape, lambda c, i: (0, 0)),
            # parameter slab: row-tiles, split across the parallel axis.
            pl.BlockSpec((tile_r, LANES), lambda c, i: (c * inner_tiles + i, 0)),
            # per-row weights (rows, 1): tiny side stream instead of a full slab.
            pl.BlockSpec((tile_r, 1), lambda c, i: (c * inner_tiles + i, 0)),
        ],
        out_specs=pl.BlockSpec((SUBLANES, LANES), lambda c, i: (c, 0)),
        scratch_shapes=[pltpu.VMEM((SUBLANES, LANES), jnp.float32)],
    )

    bytes_accessed = int(
        slab.size * slab.dtype.itemsize
        + row_w.size * 4
        + pred.size * pred.dtype.itemsize
        + target.size * target.dtype.itemsize
        + SPLIT * SUBLANES * LANES * 4
    )
    cost = pl.CostEstimate(flops=3 * int(slab.size) + 3 * int(pred.size),
                           transcendentals=0,
                           bytes_accessed=bytes_accessed)

    out = pl.pallas_call(
        kernel,
        out_shape=jax.ShapeDtypeStruct((SPLIT * SUBLANES, LANES), jnp.float32),
        grid_spec=grid_spec,
        compiler_params=pltpu.CompilerParams(
            dimension_semantics=("parallel", "arbitrary"),
            vmem_limit_bytes=32 * 1024 * 1024,
        ),
        cost_estimate=cost,
    )(pred, target, slab, row_w)

    # Each parallel half wrote its partial (base folded into half 0); sum them.
    return jnp.sum(out[::SUBLANES, 0])


if __name__ == "__main__":
    key = jax.random.PRNGKey(0)
    k_pred, k_tgt, k_conv, k_lin = jax.random.split(key, 4)

    # "Model" parameters (deterministic init).  Only non-bias params are
    # regularised, matching the `if 'bias' not in name` filter in __init__.
    conv_weight = jax.random.normal(k_conv, (4, 4, 3, 3), dtype=jnp.float32) * 0.1
    linear_weight = jax.random.normal(k_lin, (32, 10), dtype=jnp.float32) * 0.1
    params = [conv_weight, linear_weight]   # biases intentionally excluded

    # Inputs to the wrapped base loss (MSELoss): predictions and targets.
    pred = jax.random.normal(k_pred, (8, 16), dtype=jnp.float32)
    target = jax.random.normal(k_tgt, (8, 16), dtype=jnp.float32)

    factor = 0.0005
    fn = jax.jit(functools.partial(reg_loss_wrapper, factor=factor))
    out = fn(pred, target, params)
    out = jax.block_until_ready(out)

    # Pure-JAX reference (matches PyTorch semantics exactly).
    ref = jnp.mean((pred - target) ** 2) + factor * sum(
        jnp.mean(jnp.abs(p)) for p in params
    )
    assert jnp.allclose(out, ref, rtol=1e-5, atol=1e-6), (out, ref)

    print("KERNEL_OK")
</pallas_src>

<mosaic_0001>
module attributes {stable_mosaic.version = 11 : i64} {
  func.func @_reg_loss_kernel(%arg0: i32, %arg1: i32, %arg2: memref<8x16xf32, #tpu.memory_space<vmem>>, %arg3: memref<8x16xf32, #tpu.memory_space<vmem>>, %arg4: memref<8x128xf32, #tpu.memory_space<vmem>>, %arg5: memref<8x1xf32, #tpu.memory_space<vmem>>, %arg6: memref<8x128xf32, #tpu.memory_space<vmem>>, %arg7: memref<8x128xf32, #tpu.memory_space<vmem>>) attributes {dimension_semantics = [#tpu.dimension_semantics<parallel>, #tpu.dimension_semantics<arbitrary>], iteration_bounds = array<i64: 2, 1>, scalar_prefetch = 0 : i64, scratch_operands = 1 : i64, tpu.core_type = #tpu.core_type<tc>, window_params = [{pipeline_mode = #tpu.pipeline_mode<synchronous>, transform_indices = @transform_0, window_bounds = array<i64: 8, 16>}, {pipeline_mode = #tpu.pipeline_mode<synchronous>, transform_indices = @transform_1, window_bounds = array<i64: 8, 16>}, {transform_indices = @transform_2, window_bounds = array<i64: 8, 128>}, {transform_indices = @transform_3, window_bounds = array<i64: 8, 1>}, {transform_indices = @transform_4, window_bounds = array<i64: 8, 128>}]} {
    %c0_i32 = arith.constant 0 : i32
    %0 = arith.cmpi eq, %arg1, %c0_i32 : i32
    %1 = arith.extui %0 : i1 to i32
    %c0_i32_0 = arith.constant 0 : i32
    %2 = arith.cmpi ne, %1, %c0_i32_0 : i32
    scf.if %2 {
      %cst_14 = arith.constant 0.000000e+00 : f32
      %23 = vector.broadcast %cst_14 : f32 to vector<8x128xf32>
      %c0_15 = arith.constant 0 : index
      %c0_16 = arith.constant 0 : index
      %24 = vector.load %arg7[%c0_15, %c0_16] : memref<8x128xf32, #tpu.memory_space<vmem>>, vector<8x128xf32>
      tpu.vector_store %arg7[%c0_15, %c0_16], %23 {strides = array<i32>} : memref<8x128xf32, #tpu.memory_space<vmem>>, vector<8x128xf32>,
    } else {
    }
    %c0 = arith.constant 0 : index
    %c0_1 = arith.constant 0 : index
    %3 = vector.load %arg4[%c0, %c0_1] : memref<8x128xf32, #tpu.memory_space<vmem>>, vector<8x128xf32>
    %4 = math.absf %3 : vector<8x128xf32>
    %c0_2 = arith.constant 0 : index
    %c0_3 = arith.constant 0 : index
    %5 = vector.load %arg5[%c0_2, %c0_3] : memref<8x1xf32, #tpu.memory_space<vmem>>, vector<8x1xf32>
    %6 = vector.broadcast %5 : vector<8x1xf32> to vector<8x128xf32>
    %7 = arith.mulf %4, %6 : vector<8x128xf32>
    %c0_4 = arith.constant 0 : index
    %c0_5 = arith.constant 0 : index
    %8 = vector.load %arg7[%c0_4, %c0_5] : memref<8x128xf32, #tpu.memory_space<vmem>>, vector<8x128xf32>
    %9 = vector.shape_cast %7 : vector<8x128xf32> to vector<1x8x128xf32>
    %cst = arith.constant dense<0.000000e+00> : vector<8x128xf32>
    %10 = vector.multi_reduction <add>, %9, %cst [0] : vector<1x8x128xf32> to vector<8x128xf32>
    %11 = arith.addf %8, %10 : vector<8x128xf32>
    %c0_6 = arith.constant 0 : index
    %c0_7 = arith.constant 0 : index
    %12 = vector.load %arg7[%c0_6, %c0_7] : memref<8x128xf32, #tpu.memory_space<vmem>>, vector<8x128xf32>
    tpu.vector_store %arg7[%c0_6, %c0_7], %11 {strides = array<i32>} : memref<8x128xf32, #tpu.memory_space<vmem>>, vector<8x128xf32>,
    %c0_i32_8 = arith.constant 0 : i32
    %13 = arith.cmpi eq, %arg1, %c0_i32_8 : i32
    %c0_i32_9 = arith.constant 0 : i32
    %14 = arith.cmpi ne, %arg0, %c0_i32_9 : i32
    %15 = arith.andi %13, %14 : i1
    %16 = arith.extui %15 : i1 to i32
    %c0_i32_10 = arith.constant 0 : i32
    %17 = arith.cmpi ne, %16, %c0_i32_10 : i32
    scf.if %17 {
      %c0_14 = arith.constant 0 : index
      %c0_15 = arith.constant 0 : index
      %23 = vector.load %arg7[%c0_14, %c0_15] : memref<8x128xf32, #tpu.memory_space<vmem>>, vector<8x128xf32>
      %24 = vector.shape_cast %23 : vector<8x128xf32> to vector<1x8x128xf32>
      %cst_16 = arith.constant dense<0.000000e+00> : vector<1xf32>
      %25 = vector.multi_reduction <add>, %24, %cst_16 [1, 2] : vector<1x8x128xf32> to vector<1xf32>
      %26 = vector.shape_cast %25 : vector<1xf32> to vector<1x1x1xf32>
      %27 = vector.extract %26[0, 0, 0] : f32 from vector<1x1x1xf32>
      %cst_17 = arith.constant 5.000000e-04 : f32
      %28 = arith.mulf %cst_17, %27 : f32
      %29 = vector.broadcast %28 : f32 to vector<8x128xf32>
      %c0_18 = arith.constant 0 : index
      %c0_19 = arith.constant 0 : index
      %30 = vector.load %arg6[%c0_18, %c0_19] : memref<8x128xf32, #tpu.memory_space<vmem>>, vector<8x128xf32>
      tpu.vector_store %arg6[%c0_18, %c0_19], %29 {strides = array<i32>} : memref<8x128xf32, #tpu.memory_space<vmem>>, vector<8x128xf32>,
    } else {
    }
    %c0_i32_11 = arith.constant 0 : i32
    %18 = arith.cmpi eq, %arg1, %c0_i32_11 : i32
    %c0_i32_12 = arith.constant 0 : i32
    %19 = arith.cmpi eq, %arg0, %c0_i32_12 : i32
    %20 = arith.andi %18, %19 : i1
    %21 = arith.extui %20 : i1 to i32
    %c0_i32_13 = arith.constant 0 : i32
    %22 = arith.cmpi ne, %21, %c0_i32_13 : i32
    scf.if %22 {
      %c0_14 = arith.constant 0 : index
      %c0_15 = arith.constant 0 : index
      %23 = vector.load %arg2[%c0_14, %c0_15] : memref<8x16xf32, #tpu.memory_space<vmem>>, vector<8x16xf32>
      %c0_16 = arith.constant 0 : index
      %c0_17 = arith.constant 0 : index
      %24 = vector.load %arg3[%c0_16, %c0_17] : memref<8x16xf32, #tpu.memory_space<vmem>>, vector<8x16xf32>
      %25 = arith.subf %23, %24 : vector<8x16xf32>
      %26 = arith.mulf %25, %25 : vector<8x16xf32>
      %27 = vector.shape_cast %26 : vector<8x16xf32> to vector<1x8x16xf32>
      %cst_18 = arith.constant dense<0.000000e+00> : vector<1xf32>
      %28 = vector.multi_reduction <add>, %27, %cst_18 [1, 2] : vector<1x8x16xf32> to vector<1xf32>
      %29 = vector.shape_cast %28 : vector<1xf32> to vector<1x1x1xf32>
      %30 = vector.extract %29[0, 0, 0] : f32 from vector<1x1x1xf32>
      %cst_19 = arith.constant 7.812500e-03 : f32
      %31 = arith.mulf %30, %cst_19 : f32
      %c0_20 = arith.constant 0 : index
      %c0_21 = arith.constant 0 : index
      %32 = vector.load %arg7[%c0_20, %c0_21] : memref<8x128xf32, #tpu.memory_space<vmem>>, vector<8x128xf32>
      %33 = vector.shape_cast %32 : vector<8x128xf32> to vector<1x8x128xf32>
      %cst_22 = arith.constant dense<0.000000e+00> : vector<1xf32>
      %34 = vector.multi_reduction <add>, %33, %cst_22 [1, 2] : vector<1x8x128xf32> to vector<1xf32>
      %35 = vector.shape_cast %34 : vector<1xf32> to vector<1x1x1xf32>
      %36 = vector.extract %35[0, 0, 0] : f32 from vector<1x1x1xf32>
      %cst_23 = arith.constant 5.000000e-04 : f32
      %37 = arith.mulf %cst_23, %36 : f32
      %38 = arith.addf %31, %37 : f32
      %39 = vector.broadcast %38 : f32 to vector<8x128xf32>
      %c0_24 = arith.constant 0 : index
      %c0_25 = arith.constant 0 : index
      %40 = vector.load %arg6[%c0_24, %c0_25] : memref<8x128xf32, #tpu.memory_space<vmem>>, vector<8x128xf32>
      tpu.vector_store %arg6[%c0_24, %c0_25], %39 {strides = array<i32>} : memref<8x128xf32, #tpu.memory_space<vmem>>, vector<8x128xf32>,
    } else {
    }
    return
  }
  func.func @transform_0(%arg0: i32, %arg1: i32) -> (i32, i32) {
    %c0_i32 = arith.constant 0 : i32
    %c0_i32_0 = arith.constant 0 : i32
    %c0_i32_1 = arith.constant 0 : i32
    return %c0_i32, %c0_i32_0 : i32, i32
  }
  func.func @transform_1(%arg0: i32, %arg1: i32) -> (i32, i32) {
    %c0_i32 = arith.constant 0 : i32
    %c0_i32_0 = arith.constant 0 : i32
    %c0_i32_1 = arith.constant 0 : i32
    return %c0_i32, %c0_i32_0 : i32, i32
  }
  func.func @transform_2(%arg0: i32, %arg1: i32) -> (i32, i32) {
    %c1_i32 = arith.constant 1 : i32
    %0 = arith.muli %arg0, %c1_i32 : i32
    %1 = arith.addi %0, %arg1 : i32
    %c0_i32 = arith.constant 0 : i32
    %c0_i32_0 = arith.constant 0 : i32
    return %1, %c0_i32 : i32, i32
  }
  func.func @transform_3(%arg0: i32, %arg1: i32) -> (i32, i32) {
    %c1_i32 = arith.constant 1 : i32
    %0 = arith.muli %arg0, %c1_i32 : i32
    %1 = arith.addi %0, %arg1 : i32
    %c0_i32 = arith.constant 0 : i32
    %c0_i32_0 = arith.constant 0 : i32
    return %1, %c0_i32 : i32, i32
  }
  func.func @transform_4(%arg0: i32, %arg1: i32) -> (i32, i32) {
    %c0_i32 = arith.constant 0 : i32
    %c0_i32_0 = arith.constant 0 : i32
    return %arg0, %c0_i32 : i32, i32
  }
}

</mosaic_0001>

<llo_original>
// kernel: reg_loss_wrapper.1
$region0: #{reg_loss_wrapper.1}
  #allocation0 [shape = 'u32[]', space=smem, size = 0x4, offset = 0x4, fixed_abs, tag = 'smem constant byte address 0x4 - core index']
  #allocation1 [shape = 'u32[72,128]{1,0:T(1,128)}', space=vmem, size = 0x9000, scoped, tag = 'internal scratch']
  #allocation2 [shape = 'f32[8,128]{1,0:T(8,128)}', space=vmem, size = 0x1000, scoped, tag = 'scratch operand']
  %s0 = inlined_call_operand.vmem [shape: f32[8,16], index: 0, kind: input, shape index: {}]
  %s1 = inlined_call_operand.vmem [shape: f32[8,16], index: 1, kind: input, shape index: {}]
  %s2 = inlined_call_operand.vmem [shape: f32[16,128], index: 2, kind: input, shape index: {}]
  %s3 = inlined_call_operand.vmem [shape: f32[16,1], index: 3, kind: input, shape index: {}]
  %s4 = inlined_call_operand.vmem [shape: f32[16,128], index: 4, kind: output, shape index: {}]
  %s5 = sld [smem:[#allocation0]]
  $region61: #{reg_loss_wrapper.1} parent=0
    _
  %s7 = ssub.s32 1, %s5
  %s8 = scalar_select 0, %s7, %s5
  loop: start=0, step=1, limit=4
  $region2: #{reg_loss_wrapper.1} parent=0 // loop_pre_header
    _
  $region3: #{reg_loss_wrapper.1} parent=0 // loop_header
    %s10 = sphi 0, %s14
    %p11 = scmp.ge.s32.totalorder %s10, 4
    %s17 = sphi 0, %s29
    %s18 = sphi 0, %s25
    %s19 = sphi 0, %s17
    %s20 = sphi 0, %s18
    %s21 = sphi 0, %s19
    %s22 = sphi 0, %s20
    %s30 = sphi 0, %s30
    %s32 = sphi 0, %s30
    %s33 = sphi 0, %s32
    %s47 = sphi 0, %s33
    %s51 = sphi 0, %s51
    %s53 = sphi 0, %s51
    %s54 = sphi 0, %s53
    %s68 = sphi 0, %s54
    %s76 = sphi 0, %s78
    %s79 = sphi 0, %s76
    %s80 = sphi 0, %s79
    %s96 = sphi 0, %s80
    %s104 = sphi 0, %s106
    %s107 = sphi 0, %s104
    %s108 = sphi 0, %s107
    %s124 = sphi 0, %s108
    %s130 = sphi 0, %s132
    %s133 = sphi 0, %s130
    %s134 = sphi 0, %s133
    %s150 = sphi 0, %s134
  $region4: #{reg_loss_wrapper.1} parent=0 // loop_header_branch
    %13 = sbr.rel (%p11) target = $region8
  $region5: #{reg_loss_wrapper.1} parent=0 // loop_body
    %s15 = ssub.s32 %s10, 1
    %s16 = ssub.s32 %s10, 2
    %s23 = sadd.s32 1, %s18
    %p24 = scmp.ge.s32.totalorder %s23, 1
    %s25 = scalar_select %p24, 0, %s23
    %s26 = sadd.s32 1, %s17
    %s27 = scalar_select %p24, %s26, %s17
    %p28 = scmp.ge.s32.totalorder %s27, 2
    %s29 = scalar_select %p28, 0, %s27
    %s31 = sadd.s32 %s30, 1
    %p34 = scmp.eq.s32.totalorder %s10, 1
    %p35 = scmp.ne.s32.totalorder %s30, %s32
    %p36 = scmp.eq.s32.totalorder %s10, 0
    %p37 = por %p35, %p36
    %p38 = scmp.ne.s32.totalorder %s30, %s32
    %p39 = scmp.eq.s32.totalorder %s15, 1
    %p40 = por %p38, %p39
    %p41 = scmp.ne.s32.totalorder %s32, %s33
    %p42 = scmp.eq.s32.totalorder %s15, 0
    %p43 = por %p41, %p42
    %p44 = scmp.ne.s32.totalorder %s32, %s33
    %p45 = scmp.eq.s32.totalorder %s16, 1
    %p46 = por %p44, %p45
    %p48 = scmp.ne.s32.totalorder %s33, %s47
    %p49 = scmp.eq.s32.totalorder %s16, 0
    %p50 = por %p48, %p49
    %s52 = sadd.s32 %s51, 1
    %p55 = scmp.eq.s32.totalorder %s10, 1
    %p56 = scmp.ne.s32.totalorder %s51, %s53
    %p57 = scmp.eq.s32.totalorder %s10, 0
    %p58 = por %p56, %p57
    %p59 = scmp.ne.s32.totalorder %s51, %s53
    %p60 = scmp.eq.s32.totalorder %s15, 1
    %p61 = por %p59, %p60
    %p62 = scmp.ne.s32.totalorder %s53, %s54
    %p63 = scmp.eq.s32.totalorder %s15, 0
    %p64 = por %p62, %p63
    %p65 = scmp.ne.s32.totalorder %s53, %s54
    %p66 = scmp.eq.s32.totalorder %s16, 1
    %p67 = por %p65, %p66
    %p69 = scmp.ne.s32.totalorder %s54, %s68
    %p70 = scmp.eq.s32.totalorder %s16, 0
    %p71 = por %p69, %p70
    %s72 = sadd.s32 %s17, %s18
    %s73 = sadd.s32 %s29, %s25
    %s74 = ssub.s32 %s72, %s73
    %p75 = scmp.eq.s32.totalorder %s74, 0
    %s77 = sadd.s32 %s76, 1
    %s78 = scalar_select %p75, %s76, %s77
    %p81 = pneg %p75
    %p82 = scmp.eq.s32.totalorder %s10, 1
    %p83 = por %p81, %p82
    %p84 = scmp.ne.s32.totalorder %s76, %s79
    %p85 = scmp.eq.s32.totalorder %s10, 0
    %p86 = por %p84, %p85
    %p87 = scmp.ne.s32.totalorder %s76, %s79
    %p88 = scmp.eq.s32.totalorder %s15, 1
    %p89 = por %p87, %p88
    %p90 = scmp.ne.s32.totalorder %s79, %s80
    %p91 = scmp.eq.s32.totalorder %s15, 0
    %p92 = por %p90, %p91
    %p93 = scmp.ne.s32.totalorder %s79, %s80
    %p94 = scmp.eq.s32.totalorder %s16, 1
    %p95 = por %p93, %p94
    %p97 = scmp.ne.s32.totalorder %s80, %s96
    %p98 = scmp.eq.s32.totalorder %s16, 0
    %p99 = por %p97, %p98
    %s100 = sadd.s32 %s17, %s18
    %s101 = sadd.s32 %s29, %s25
    %s102 = ssub.s32 %s100, %s101
    %p103 = scmp.eq.s32.totalorder %s102, 0
    %s105 = sadd.s32 %s104, 1
    %s106 = scalar_select %p103, %s104, %s105
    %p109 = pneg %p103
    %p110 = scmp.eq.s32.totalorder %s10, 1
    %p111 = por %p109, %p110
    %p112 = scmp.ne.s32.totalorder %s104, %s107
    %p113 = scmp.eq.s32.totalorder %s10, 0
    %p114 = por %p112, %p113
    %p115 = scmp.ne.s32.totalorder %s104, %s107
    %p116 = scmp.eq.s32.totalorder %s15, 1
    %p117 = por %p115, %p116
    %p118 = scmp.ne.s32.totalorder %s107, %s108
    %p119 = scmp.eq.s32.totalorder %s15, 0
    %p120 = por %p118, %p119
    %p121 = scmp.ne.s32.totalorder %s107, %s108
    %p122 = scmp.eq.s32.totalorder %s16, 1
    %p123 = por %p121, %p122
    %p125 = scmp.ne.s32.totalorder %s108, %s124
    %p126 = scmp.eq.s32.totalorder %s16, 0
    %p127 = por %p125, %p126
    %s128 = ssub.s32 %s17, %s29
    %p129 = scmp.eq.s32.totalorder %s128, 0
    %s131 = sadd.s32 %s130, 1
    %s132 = scalar_select %p129, %s130, %s131
    %p135 = pneg %p129
    %p136 = scmp.eq.s32.totalorder %s10, 1
    %p137 = por %p135, %p136
    %p138 = scmp.ne.s32.totalorder %s130, %s133
    %p139 = scmp.eq.s32.totalorder %s10, 0
    %p140 = por %p138, %p139
    %p141 = scmp.ne.s32.totalorder %s130, %s133
    %p142 = scmp.eq.s32.totalorder %s15, 1
    %p143 = por %p141, %p142
    %p144 = scmp.ne.s32.totalorder %s133, %s134
    %p145 = scmp.eq.s32.totalorder %s15, 0
    %p146 = por %p144, %p145
    %p147 = scmp.ne.s32.totalorder %s133, %s134
    %p148 = scmp.eq.s32.totalorder %s16, 1
    %p149 = por %p147, %p148
    %p151 = scmp.ne.s32.totalorder %s134, %s150
    %p152 = scmp.eq.s32.totalorder %s16, 0
    %p153 = por %p151, %p152
    %p154 = scmp.le.s32.totalorder 1, %s10
    %p155 = scmp.lt.s32.totalorder %s10, 3
    %p156 = pnand %p154, %p155
    %p157 = pneg %p156
    // Predicated region
    $region9: #{reg_loss_wrapper.1} parent=5 // pred_check
      _
    $region10: #{reg_loss_wrapper.1} parent=5 // pred_check_branch
      %159 = sbr.rel (%p156) target = $region12
    $region11: #{reg_loss_wrapper.1} parent=5 // pred_region
      %s160 = ssub.s32 %s10, 1
      // Predicated region
      $region13: #{reg_loss_wrapper.1} parent=11 // pred_check
        %p161 = pneg %p43
      $region14: #{reg_loss_wrapper.1} parent=11 // pred_check_branch
        %163 = sbr.rel (%p161) target = $region16
      $region15: #{reg_loss_wrapper.1} parent=11 // pred_region
        _
      $region16: #{reg_loss_wrapper.1} parent=11 // pred_fallthru
        _
      // Predicated region
      $region17: #{reg_loss_wrapper.1} parent=11 // pred_check
        %p164 = pneg %p64
      $region18: #{reg_loss_wrapper.1} parent=11 // pred_check_branch
        %166 = sbr.rel (%p164) target = $region20
      $region19: #{reg_loss_wrapper.1} parent=11 // pred_region
        _
      $region20: #{reg_loss_wrapper.1} parent=11 // pred_fallthru
        _
    $region12: #{reg_loss_wrapper.1} parent=5 // pred_fallthru
      _
    %p167 = scmp.lt.s32.totalorder %s10, 2
    // Predicated region
    $region21: #{reg_loss_wrapper.1} parent=5 // pred_check
      %p168 = pneg %p167
    $region22: #{reg_loss_wrapper.1} parent=5 // pred_check_branch
      %170 = sbr.rel (%p168) target = $region24
    $region23: #{reg_loss_wrapper.1} parent=5 // pred_region
      // Predicated region
      $region25: #{reg_loss_wrapper.1} parent=23 // pred_check
        %p171 = pneg %p86
      $region26: #{reg_loss_wrapper.1} parent=23 // pred_check_branch
        %173 = sbr.rel (%p171) target = $region28
      $region27: #{reg_loss_wrapper.1} parent=23 // pred_region
        %s174 = sadd.s32 %s17, %s18
        %p175 = scmp.lt.s32.totalorder %s174, 1
        %s176 = scalar_select %p175, %s174, 1
        %s177 = smul.addr %s176, 8
        %s178 = scalar_lea.vmem %s2, %s177
        %s179 = sadd.s32 %s17, %s18
      $region28: #{reg_loss_wrapper.1} parent=23 // pred_fallthru
        _
      // Predicated region
      $region29: #{reg_loss_wrapper.1} parent=23 // pred_check
        %p180 = pneg %p114
      $region30: #{reg_loss_wrapper.1} parent=23 // pred_check_branch
        %182 = sbr.rel (%p180) target = $region32
      $region31: #{reg_loss_wrapper.1} parent=23 // pred_region
        %s183 = sadd.s32 %s17, %s18
        %p184 = scmp.lt.s32.totalorder %s183, 1
        %s185 = scalar_select %p184, %s183, 1
        %s186 = smul.addr %s185, 8
        %s187 = scalar_lea.vmem %s3, %s186
        %s188 = sadd.s32 %s17, %s18
      $region32: #{reg_loss_wrapper.1} parent=23 // pred_fallthru
        _
    $region24: #{reg_loss_wrapper.1} parent=5 // pred_fallthru
      _
    %p189 = scmp.le.s32.totalorder 1, %s10
    %p190 = scmp.lt.s32.totalorder %s10, 3
    %p191 = pnand %p189, %p190
    %p192 = pneg %p191
    // Predicated region
    $region33: #{reg_loss_wrapper.1} parent=5 // pred_check
      _
    $region34: #{reg_loss_wrapper.1} parent=5 // pred_check_branch
      %194 = sbr.rel (%p191) target = $region36
    $region35: #{reg_loss_wrapper.1} parent=5 // pred_region
      %s195 = ssub.s32 %s10, 1
      %p196 = pneg %p43
      %p197 = pneg %p40
      %p198 = pneg %p64
      %p199 = pneg %p61
      %s200 = sadd.s32 %s19, %s20
      %p201 = scmp.lt.s32.totalorder %s200, 1
      %s202 = scalar_select %p201, %s200, 1
      %s203 = smul.addr %s202, 8
      %s204 = scalar_lea.vmem %s2, %s203
      %p205 = pneg %p92
      %p206 = pneg %p89
      %s207 = sadd.s32 %s19, %s20
      %p208 = scmp.lt.s32.totalorder %s207, 1
      %s209 = scalar_select %p208, %s207, 1
      %s210 = smul.addr %s209, 8
      %s211 = scalar_lea.vmem %s3, %s210
      %p212 = pneg %p120
      %p213 = pneg %p117
      %p214 = pneg %p146
      %p215 = pneg %p143
      %p216 = scmp.lt.s32.totalorder %s19, 1
      %s217 = scalar_select %p216, %s19, 1
      %s218 = smul.addr %s217, 8
      %s219 = scalar_lea.vmem %s4, %s218
      %s220 = sadd.s32 %s19, %s20
      %p221 = scmp.lt.s32.totalorder %s220, 1
      %s222 = scalar_select %p221, %s220, 1
      %s223 = smul.addr %s222, 8
      %s224 = scalar_lea.vmem %s2, %s223
      %s225 = sadd.s32 %s19, %s20
      %s226 = sadd.s32 %s19, %s20
      %p227 = scmp.lt.s32.totalorder %s226, 1
      %s228 = scalar_select %p227, %s226, 1
      %s229 = smul.addr %s228, 8
      %s230 = scalar_lea.vmem %s3, %s229
      %s231 = sadd.s32 %s19, %s20
      %p232 = scmp.lt.s32.totalorder %s19, 1
      %s233 = scalar_select %p232, %s19, 1
      %s234 = smul.addr %s233, 8
      %s235 = scalar_lea.vmem %s4, %s234
      %p236 = scmp.eq.s32.totalorder %s20, 0
      // Predicated region
      $region37: #{reg_loss_wrapper.1} parent=35 // pred_check
        %p237 = pneg %p236
      $region38: #{reg_loss_wrapper.1} parent=35 // pred_check_branch
        %239 = sbr.rel (%p237) target = $region40
      $region39: #{reg_loss_wrapper.1} parent=35 // pred_region
        %240 = vst [vmem:[#allocation2] sm:$0xff] 0.0
      $region40: #{reg_loss_wrapper.1} parent=35 // pred_fallthru
        _
      %v241 = vld [vmem:[%s224] sm:$0xff]
      %v242 = vand.u32 2147483647, %v241
      %v243 = vld [vmem:[%s230] sm:$0xff]
      %245 = vset.pattern.permute.xlu0 0
      %246 = vperm.xlu0 %245, %v243
      %v247 = vpop.permute.xlu0 %246
      %v249 = vmul.f32 %v242, %v247
      %v250 = vld [vmem:[#allocation2] sm:$0xff]
      %v251 = vadd.f32 %v249, 0.0
      %v252 = vadd.f32 %v250, %v251
      %253 = vst [vmem:[#allocation2] sm:$0xff] %v252
      %p254 = scmp.ne.s32.totalorder %s19, 0
      %p255 = pnand %p236, %p254
      %p256 = pneg %p255
      // Predicated region
      $region41: #{reg_loss_wrapper.1} parent=35 // pred_check
        _
      $region42: #{reg_loss_wrapper.1} parent=35 // pred_check_branch
        %258 = sbr.rel (%p255) target = $region44
      $region43: #{reg_loss_wrapper.1} parent=35 // pred_region
        %v259 = vld [vmem:[#allocation2] sm:$0xff]
        %260 = vadd.xlane.f32.xlu0 %v259
        %v261 = vpop.xlane.xlu0 %260
        %v262 = vrot.slane %v261, 4
        %v263 = vadd.f32 %v261, %v262
        %v264 = vrot.slane %v263, 2
        %v265 = vadd.f32 %v263, %v264
        %v266 = vrot.slane %v265, 1
        %v267 = vadd.f32 %v265, %v266
        %s268 = vtos %v267
        %s269 = smul.f32 %s268, 0.0005
        %v270 = vstv %s269
        %271 = vst [vmem:[%s235] sm:$0xff] %v270
      $region44: #{reg_loss_wrapper.1} parent=35 // pred_fallthru
        _
      %p272 = scmp.eq.s32.totalorder %s19, 0
      %p273 = pnand %p236, %p272
      %p274 = pneg %p273
      // Predicated region
      $region45: #{reg_loss_wrapper.1} parent=35 // pred_check
        _
      $region46: #{reg_loss_wrapper.1} parent=35 // pred_check_branch
        %276 = sbr.rel (%p273) target = $region48
      $region47: #{reg_loss_wrapper.1} parent=35 // pred_region
        %v277 = vld [vmem:[%s0] sm:$0xff]
        %v278 = vld [vmem:[%s1] sm:$0xff]
        %v279 = vsub.f32 %v277, %v278
        %v280 = vmul.f32 %v279, %v279
        %vm281 = vcmask 130048
        %v282 = vsel %vm281, %v280, 0.0
        %283 = vadd.xlane.f32.xlu0 %v282
        %v284 = vpop.xlane.xlu0 %283
        %v285 = vrot.slane %v284, 4
        %v286 = vadd.f32 %v284, %v285
        %v287 = vrot.slane %v286, 2
        %v288 = vadd.f32 %v286, %v287
        %v289 = vrot.slane %v288, 1
        %v290 = vadd.f32 %v288, %v289
        %s291 = vtos %v290
        %s292 = smul.f32 %s291, 0.0078125
        %v293 = vld [vmem:[#allocation2] sm:$0xff]
        %294 = vadd.xlane.f32.xlu0 %v293
        %v295 = vpop.xlane.xlu0 %294
        %v296 = vrot.slane %v295, 4
        %v297 = vadd.f32 %v295, %v296
        %v298 = vrot.slane %v297, 2
        %v299 = vadd.f32 %v297, %v298
        %v300 = vrot.slane %v299, 1
        %v301 = vadd.f32 %v299, %v300
        %s302 = vtos %v301
        %s303 = smul.f32 %s302, 0.0005
        %s304 = sadd.f32 %s292, %s303
        %v305 = vstv %s304
        %306 = vst [vmem:[%s235] sm:$0xff] %v305
      $region48: #{reg_loss_wrapper.1} parent=35 // pred_fallthru
        _
      %p307 = scmp.lt.s32.totalorder %s19, 1
      %s308 = scalar_select %p307, %s19, 1
      %s309 = smul.addr %s308, 8
      %s310 = scalar_lea.vmem %s4, %s309
      // Predicated region
      $region49: #{reg_loss_wrapper.1} parent=35 // pred_check
        %p311 = pneg %p143
      $region50: #{reg_loss_wrapper.1} parent=35 // pred_check_branch
        %313 = sbr.rel (%p311) target = $region52
      $region51: #{reg_loss_wrapper.1} parent=35 // pred_region
        _
      $region52: #{reg_loss_wrapper.1} parent=35 // pred_fallthru
        _
    $region36: #{reg_loss_wrapper.1} parent=5 // pred_fallthru
      _
    %p314 = scmp.le.s32.totalorder 2, %s10
    // Predicated region
    $region53: #{reg_loss_wrapper.1} parent=5 // pred_check
      %p315 = pneg %p314
    $region54: #{reg_loss_wrapper.1} parent=5 // pred_check_branch
      %317 = sbr.rel (%p315) target = $region56
    $region55: #{reg_loss_wrapper.1} parent=5 // pred_region
      %s318 = ssub.s32 %s10, 2
      // Predicated region
      $region57: #{reg_loss_wrapper.1} parent=55 // pred_check
        %p319 = pneg %p149
      $region58: #{reg_loss_wrapper.1} parent=55 // pred_check_branch
        %321 = sbr.rel (%p319) target = $region60
      $region59: #{reg_loss_wrapper.1} parent=55 // pred_region
        %p322 = scmp.lt.s32.totalorder %s21, 1
        %s323 = scalar_select %p322, %s21, 1
        %s324 = smul.addr %s323, 8
        %s325 = scalar_lea.vmem %s4, %s324
      $region60: #{reg_loss_wrapper.1} parent=55 // pred_fallthru
        _
    $region56: #{reg_loss_wrapper.1} parent=5 // pred_fallthru
      _
  $region6: #{reg_loss_wrapper.1} parent=0 // loop_footer
    %s14 = sadd.s32 1, %s10
  $region7: #{reg_loss_wrapper.1} parent=0 // loop_footer_branch
    %9 = sbr.rel target = $region3
  $region8: #{reg_loss_wrapper.1} parent=0 // loop_exit
    _

</llo_original>
